<compile_context>
chip_gen: v7x
topology: tpu7x:2x2x1
jax: 0.10.0
libtpu: 0.0.40
codegen_flags: <defaults>
</compile_context>

<pallas_src>
import functools

import jax
import jax.numpy as jnp
from jax.experimental import pallas as pl
from jax.experimental.pallas import tpu as pltpu


# ----------------------------------------------------------------------------
# Phase A: spatial-sum reduction + squeeze/excite FC finalize -> gate (B, C, 1)
# ----------------------------------------------------------------------------
def _se_reduce_kernel(x_ref, w1t_ref, w2_ref, gate_ref, acc_ref, *,
                      inv_s, true_s, tile_s, need_mask):
    # x_ref   : (1, C, TS)  current (batch, spatial-tile) block
    # w1t_ref : (C, C_r)    first 1x1x1 conv weight, transposed (squeeze)
    # w2_ref  : (C, C_r)    second 1x1x1 conv weight (excite)
    # gate_ref: (1, C, 1)   per-channel sigmoid gate (resident across S axis)
    # acc_ref : (C, 1) f32  running spatial sum
    si = pl.program_id(1)

    @pl.when(si == 0)
    def _():
        acc_ref[...] = jnp.zeros_like(acc_ref)

    x = x_ref[0]                                           # (C, TS) native dtype
    if need_mask:
        # Ragged final tile: zero the lanes past the true spatial size so the
        # unspecified OOB data never reaches the sum.  VPU-only, hidden under
        # the memory-bound pipeline; compiled out entirely when TS | S.
        idx = si * tile_s + jax.lax.broadcasted_iota(jnp.int32, x.shape, 1)
        x = jnp.where(idx < true_s, x, jnp.zeros_like(x))

    # f32-accumulated spatial sum without materializing an f32 copy of the tile.
    acc_ref[...] += jnp.sum(x, axis=1, keepdims=True, dtype=jnp.float32)

    @pl.when(si == pl.num_programs(1) - 1)
    def _():
        y = acc_ref[...] * inv_s                          # (C, 1) true mean (f32)
        w1t = w1t_ref[...].astype(jnp.float32)            # (C, C_r) tiny
        w2 = w2_ref[...].astype(jnp.float32)              # (C, C_r) tiny
        # FC1 + ReLU: h[r] = relu(sum_c w1[r, c] * y[c])  -> VPU mul + sublane reduce
        h = jnp.maximum(jnp.sum(w1t * y, axis=0, keepdims=True), 0.0)   # (1, C_r)
        # FC2: s[c] = sum_r w2[c, r] * h[r]               -> VPU mul + lane reduce
        s = jnp.sum(w2 * h, axis=1, keepdims=True)                       # (C, 1)
        gate_ref[0] = jax.nn.sigmoid(s).astype(gate_ref.dtype)


# ----------------------------------------------------------------------------
# Phase B: stream x tiles and apply the per-channel gate in the native dtype.
# ----------------------------------------------------------------------------
def _se_scale_kernel(gate_ref, x_ref, o_ref):
    # gate_ref: (1, C, 1), x_ref/o_ref: (1, C, TS)
    s = gate_ref[0].astype(o_ref.dtype)                   # (C, 1)
    o_ref[0] = x_ref[0] * s


def se_forward(x, w1, w2, *, tile_spatial=None):
    """SE forward.

    x : (B, C, D, H, W)
    w1: (C_r, C)  -- Conv3d(C -> C_r, 1x1x1, bias=False) weight
    w2: (C, C_r)  -- Conv3d(C_r -> C, 1x1x1, bias=False) weight
    """
    B, C, D, H, W = x.shape
    S = D * H * W
    C_r = w1.shape[0]
    dtype_bytes = jnp.dtype(x.dtype).itemsize

    # ---- spatial tile: 128-aligned (lane-dense), ~2 MiB per (C, TS) buffer ----
    # (2 MiB keeps phase B's 4 double-buffered tiles inside v5e's 16 MiB scoped
    #  VMEM default while amortizing the ~0.35 us per-step pipeline overhead.)
    if tile_spatial is None:
        target_bytes = 2 * 1024 * 1024
        ts = max(128, (target_bytes // (C * dtype_bytes)) // 128 * 128)
    else:
        ts = max(128, (tile_spatial // 128) * 128)
    ts = min(ts, pl.cdiv(S, 128) * 128)
    n_s = pl.cdiv(S, ts)            # ragged final tile handled in-kernel
    need_mask = (S % ts) != 0

    x_flat = x.reshape(B, C, S)     # free (contiguous) — no padding copy
    w1t = jnp.transpose(w1)         # (C, C_r): channel axis on sublanes for both FCs
    bytes_x = B * C * S * dtype_bytes

    # ------------------------- Phase A: reduce + FC ---------------------------
    gate = pl.pallas_call(
        functools.partial(_se_reduce_kernel, inv_s=1.0 / float(S),
                          true_s=S, tile_s=ts, need_mask=need_mask),
        out_shape=jax.ShapeDtypeStruct((B, C, 1), jnp.float32),
        grid_spec=pltpu.PrefetchScalarGridSpec(
            num_scalar_prefetch=0,
            grid=(B, n_s),
            in_specs=[
                pl.BlockSpec((1, C, ts), lambda b, si: (b, 0, si)),
                pl.BlockSpec((C, C_r), lambda b, si: (0, 0)),
                pl.BlockSpec((C, C_r), lambda b, si: (0, 0)),
            ],
            out_specs=pl.BlockSpec((1, C, 1), lambda b, si: (b, 0, 0)),
            scratch_shapes=[pltpu.VMEM((C, 1), jnp.float32)],
        ),
        compiler_params=pltpu.CompilerParams(
            dimension_semantics=("parallel", "arbitrary")),
        cost_estimate=pl.CostEstimate(
            flops=B * C * S + 4 * B * C * C_r,
            transcendentals=B * C,
            bytes_accessed=bytes_x + B * C * 4),
    )(x_flat, w1t, w2)

    # --------------------------- Phase B: scale -------------------------------
    out_flat = pl.pallas_call(
        _se_scale_kernel,
        out_shape=jax.ShapeDtypeStruct((B, C, S), x.dtype),
        grid_spec=pltpu.PrefetchScalarGridSpec(
            num_scalar_prefetch=0,
            grid=(B, n_s),
            in_specs=[
                pl.BlockSpec((1, C, 1), lambda b, si: (b, 0, 0)),
                pl.BlockSpec((1, C, ts), lambda b, si: (b, 0, si)),
            ],
            out_specs=pl.BlockSpec((1, C, ts), lambda b, si: (b, 0, si)),
        ),
        compiler_params=pltpu.CompilerParams(
            dimension_semantics=("parallel", "parallel")),
        cost_estimate=pl.CostEstimate(
            flops=B * C * S,
            transcendentals=0,
            bytes_accessed=2 * bytes_x + B * C * 4),
    )(gate, x_flat)

    return out_flat.reshape(B, C, D, H, W)


def se_reference(x, w1, w2):
    """Pure-JAX reference mirroring the PyTorch module."""
    y = jnp.mean(x, axis=(2, 3, 4))                               # (B, C)
    h = jnp.maximum(jnp.einsum('rc,bc->br', w1, y), 0.0)          # (B, C_r)
    s = jax.nn.sigmoid(jnp.einsum('cr,br->bc', w2, h))            # (B, C)
    return x * s[:, :, None, None, None]


if __name__ == "__main__":
    reduction_ratio = 4

    key = jax.random.PRNGKey(0)
    kx, k1, k2, kx2 = jax.random.split(key, 4)

    # Test 1: small shape, single spatial tile (TS | S, mask compiled out).
    B, C, D, H, W = 2, 8, 4, 8, 8
    C_r = C // reduction_ratio
    x = jax.random.normal(kx, (B, C, D, H, W), dtype=jnp.float32)
    w1 = 0.1 * jax.random.normal(k1, (C_r, C), dtype=jnp.float32)
    w2 = 0.1 * jax.random.normal(k2, (C, C_r), dtype=jnp.float32)

    out = se_forward(x, w1, w2)
    jax.block_until_ready(out)
    ref = se_reference(x, w1, w2)
    assert jnp.allclose(out, ref, atol=1e-5, rtol=1e-5), "mismatch vs reference (test 1)"

    # Test 2: non-128-multiple spatial size + forced multi-tile reduction
    # (exercises ragged final tile masking, accumulator across S tiles,
    #  true-S mean, and partial-block output writes).
    D2, H2, W2 = 5, 6, 7   # S = 210 -> 2 tiles of 128, last one ragged
    x2 = jax.random.normal(kx2, (B, C, D2, H2, W2), dtype=jnp.float32)
    out2 = se_forward(x2, w1, w2, tile_spatial=128)
    jax.block_until_ready(out2)
    ref2 = se_reference(x2, w1, w2)
    assert jnp.allclose(out2, ref2, atol=1e-5, rtol=1e-5), "mismatch vs reference (test 2)"

    print("KERNEL_OK")
</pallas_src>

<mosaic_0001>
module attributes {stable_mosaic.version = 11 : i64} {
  func.func @_se_reduce_kernel(%arg0: i32, %arg1: i32, %arg2: memref<1x8x256xf32, #tpu.memory_space<vmem>>, %arg3: memref<8x2xf32, #tpu.memory_space<vmem>>, %arg4: memref<8x2xf32, #tpu.memory_space<vmem>>, %arg5: memref<1x8x1xf32, #tpu.memory_space<vmem>>, %arg6: memref<8x1xf32, #tpu.memory_space<vmem>>) attributes {dimension_semantics = [#tpu.dimension_semantics<parallel>, #tpu.dimension_semantics<arbitrary>], iteration_bounds = array<i64: 2, 1>, scalar_prefetch = 0 : i64, scratch_operands = 1 : i64, tpu.core_type = #tpu.core_type<tc>, window_params = [{transform_indices = @transform_0, window_bounds = array<i64: 1, 8, 256>}, {pipeline_mode = #tpu.pipeline_mode<synchronous>, transform_indices = @transform_1, window_bounds = array<i64: 8, 2>}, {pipeline_mode = #tpu.pipeline_mode<synchronous>, transform_indices = @transform_2, window_bounds = array<i64: 8, 2>}, {transform_indices = @transform_3, window_bounds = array<i64: 1, 8, 1>}]} {
    %c0_i32 = arith.constant 0 : i32
    %0 = arith.cmpi eq, %arg1, %c0_i32 : i32
    %1 = arith.extui %0 : i1 to i32
    %c0_i32_0 = arith.constant 0 : i32
    %2 = arith.cmpi ne, %1, %c0_i32_0 : i32
    scf.if %2 {
      %cst_9 = arith.constant 0.000000e+00 : f32
      %13 = vector.broadcast %cst_9 : f32 to vector<8x1xf32>
      %c0_10 = arith.constant 0 : index
      %c0_11 = arith.constant 0 : index
      %14 = vector.load %arg6[%c0_10, %c0_11] : memref<8x1xf32, #tpu.memory_space<vmem>>, vector<8x1xf32>
      tpu.vector_store %arg6[%c0_10, %c0_11], %13 {strides = array<i32>} : memref<8x1xf32, #tpu.memory_space<vmem>>, vector<8x1xf32>,
    } else {
    }
    %c0 = arith.constant 0 : index
    %c0_1 = arith.constant 0 : index
    %c0_2 = arith.constant 0 : index
    %3 = vector.load %arg2[%c0, %c0_1, %c0_2] : memref<1x8x256xf32, #tpu.memory_space<vmem>>, vector<1x8x256xf32>
    %4 = vector.shape_cast %3 : vector<1x8x256xf32> to vector<8x256xf32>
    %c0_3 = arith.constant 0 : index
    %c0_4 = arith.constant 0 : index
    %5 = vector.load %arg6[%c0_3, %c0_4] : memref<8x1xf32, #tpu.memory_space<vmem>>, vector<8x1xf32>
    %cst = arith.constant dense<0.000000e+00> : vector<8xf32>
    %6 = vector.multi_reduction <add>, %4, %cst [1] : vector<8x256xf32> to vector<8xf32>
    %7 = vector.shape_cast %6 : vector<8xf32> to vector<8x1xf32>
    %8 = arith.addf %5, %7 : vector<8x1xf32>
    %c0_5 = arith.constant 0 : index
    %c0_6 = arith.constant 0 : index
    %9 = vector.load %arg6[%c0_5, %c0_6] : memref<8x1xf32, #tpu.memory_space<vmem>>, vector<8x1xf32>
    tpu.vector_store %arg6[%c0_5, %c0_6], %8 {strides = array<i32>} : memref<8x1xf32, #tpu.memory_space<vmem>>, vector<8x1xf32>,
    %c0_i32_7 = arith.constant 0 : i32
    %10 = arith.cmpi eq, %arg1, %c0_i32_7 : i32
    %11 = arith.extui %10 : i1 to i32
    %c0_i32_8 = arith.constant 0 : i32
    %12 = arith.cmpi ne, %11, %c0_i32_8 : i32
    scf.if %12 {
      %c0_9 = arith.constant 0 : index
      %c0_10 = arith.constant 0 : index
      %13 = vector.load %arg6[%c0_9, %c0_10] : memref<8x1xf32, #tpu.memory_space<vmem>>, vector<8x1xf32>
      %cst_11 = arith.constant 3.906250e-03 : f32
      %14 = vector.broadcast %cst_11 : f32 to vector<8x1xf32>
      %15 = arith.mulf %13, %14 : vector<8x1xf32>
      %c0_12 = arith.constant 0 : index
      %c0_13 = arith.constant 0 : index
      %16 = vector.load %arg3[%c0_12, %c0_13] : memref<8x2xf32, #tpu.memory_space<vmem>>, vector<8x2xf32>
      %c0_14 = arith.constant 0 : index
      %c0_15 = arith.constant 0 : index
      %17 = vector.load %arg4[%c0_14, %c0_15] : memref<8x2xf32, #tpu.memory_space<vmem>>, vector<8x2xf32>
      %18 = vector.broadcast %15 : vector<8x1xf32> to vector<8x2xf32>
      %19 = arith.mulf %16, %18 : vector<8x2xf32>
      %cst_16 = arith.constant dense<0.000000e+00> : vector<2xf32>
      %20 = vector.multi_reduction <add>, %19, %cst_16 [0] : vector<8x2xf32> to vector<2xf32>
      %21 = vector.shape_cast %20 : vector<2xf32> to vector<1x2xf32>
      %cst_17 = arith.constant 0.000000e+00 : f32
      %22 = vector.broadcast %cst_17 : f32 to vector<1x2xf32>
      %23 = arith.maximumf %21, %22 : vector<1x2xf32>
      %24 = vector.broadcast %23 : vector<1x2xf32> to vector<8x2xf32>
      %25 = arith.mulf %17, %24 : vector<8x2xf32>
      %cst_18 = arith.constant dense<0.000000e+00> : vector<8xf32>
      %26 = vector.multi_reduction <add>, %25, %cst_18 [1] : vector<8x2xf32> to vector<8xf32>
      %27 = vector.shape_cast %26 : vector<8xf32> to vector<8x1xf32>
      %28 = arith.negf %27 : vector<8x1xf32>
      %29 = math.exp %28 : vector<8x1xf32>
      %cst_19 = arith.constant 1.000000e+00 : f32
      %30 = vector.broadcast %cst_19 : f32 to vector<8x1xf32>
      %31 = arith.addf %30, %29 : vector<8x1xf32>
      %32 = arith.divf %30, %31 : vector<8x1xf32>
      %c0_20 = arith.constant 0 : index
      %c0_21 = arith.constant 0 : index
      %c0_22 = arith.constant 0 : index
      %33 = vector.load %arg5[%c0_20, %c0_21, %c0_22] : memref<1x8x1xf32, #tpu.memory_space<vmem>>, vector<1x8x1xf32>
      %34 = vector.shape_cast %33 : vector<1x8x1xf32> to vector<8x1xf32>
      %35 = vector.shape_cast %32 : vector<8x1xf32> to vector<1x8x1xf32>
      tpu.vector_store %arg5[%c0_20, %c0_21, %c0_22], %35 {strides = array<i32>} : memref<1x8x1xf32, #tpu.memory_space<vmem>>, vector<1x8x1xf32>,
    } else {
    }
    return
  }
  func.func @transform_0(%arg0: i32, %arg1: i32) -> (i32, i32, i32) {
    %c0_i32 = arith.constant 0 : i32
    %c0_i32_0 = arith.constant 0 : i32
    return %arg0, %c0_i32, %arg1 : i32, i32, i32
  }
  func.func @transform_1(%arg0: i32, %arg1: i32) -> (i32, i32) {
    %c0_i32 = arith.constant 0 : i32
    %c0_i32_0 = arith.constant 0 : i32
    %c0_i32_1 = arith.constant 0 : i32
    return %c0_i32, %c0_i32_0 : i32, i32
  }
  func.func @transform_2(%arg0: i32, %arg1: i32) -> (i32, i32) {
    %c0_i32 = arith.constant 0 : i32
    %c0_i32_0 = arith.constant 0 : i32
    %c0_i32_1 = arith.constant 0 : i32
    return %c0_i32, %c0_i32_0 : i32, i32
  }
  func.func @transform_3(%arg0: i32, %arg1: i32) -> (i32, i32, i32) {
    %c0_i32 = arith.constant 0 : i32
    %c0_i32_0 = arith.constant 0 : i32
    %c0_i32_1 = arith.constant 0 : i32
    return %arg0, %c0_i32, %c0_i32_0 : i32, i32, i32
  }
}

</mosaic_0001>

<llo_original>
// kernel: tpu_custom_call.1
$region0: #{tpu_custom_call.1}
  #allocation0 [shape = 'u32[]', space=smem, size = 0x4, offset = 0x4, fixed_abs, tag = 'smem constant byte address 0x4 - core index']
  #allocation1 [shape = 'u32[144,128]{1,0:T(1,128)}', space=vmem, size = 0x12000, scoped, tag = 'internal scratch']
  #allocation2 [shape = 'f32[8,1]{1,0:T(8,128)}', space=vmem, size = 0x1000, scoped, tag = 'scratch operand']
  %s0 = inlined_call_operand.hbm [shape: f32[2,8,256], index: 0, kind: input, shape index: {}]
  %s1 = inlined_call_operand.vmem [shape: f32[8,2], index: 1, kind: input, shape index: {}]
  %s2 = inlined_call_operand.vmem [shape: f32[8,2], index: 2, kind: input, shape index: {}]
  %s3 = inlined_call_operand.vmem [shape: f32[2,8,1], index: 3, kind: output, shape index: {}]
  %s4 = sld [smem:[#allocation0]]
  $region57: #{tpu_custom_call.1} parent=0
    _
  %s6 = ssub.s32 1, %s4
  %s7 = scalar_select 0, %s6, %s4
  $region1: #{tpu_custom_call.1} parent=0
    #allocation3 [shape = 'u8[16384]{0}', space=vmem, size = 0x4000, scoped, tag = 'input window, operand 0']
    #allocation4 [shape = 's32[2]{0}', space=sflag, size = 0x8, scoped, tag = 'scoped memory for tpu_custom_call.1']
    %8 = vsyncpa [#allocation4], 0
    %s9 = scalar_lea.sflag [#allocation4], 1
    %10 = vsyncpa %s9, 0
    loop: start=0, step=1, limit=4
    $region2: #{tpu_custom_call.1} parent=1 // loop_pre_header
      _
    $region3: #{tpu_custom_call.1} parent=1 // loop_header
      %s12 = sphi 0, %s16
      %p13 = scmp.ge.s32.totalorder %s12, 4
      %s19 = sphi 0, %s31
      %s20 = sphi 0, %s27
      %s21 = sphi 0, %s19
      %s22 = sphi 0, %s20
      %s23 = sphi 0, %s21
      %s24 = sphi 0, %s22
      %s36 = sphi 0, %s38
      %s39 = sphi 0, %s36
      %s40 = sphi 0, %s39
      %s56 = sphi 0, %s40
      %s60 = sphi 0, %s60
      %s62 = sphi 0, %s60
      %s63 = sphi 0, %s62
      %s77 = sphi 0, %s63
      %s81 = sphi 0, %s81
      %s83 = sphi 0, %s81
      %s84 = sphi 0, %s83
      %s98 = sphi 0, %s84
      %s104 = sphi 0, %s106
      %s107 = sphi 0, %s104
      %s108 = sphi 0, %s107
      %s124 = sphi 0, %s108
    $region4: #{tpu_custom_call.1} parent=1 // loop_header_branch
      %15 = sbr.rel (%p13) target = $region8
    $region5: #{tpu_custom_call.1} parent=1 // loop_body
      %s17 = ssub.s32 %s12, 1
      %s18 = ssub.s32 %s12, 2
      %s25 = sadd.s32 1, %s20
      %p26 = scmp.ge.s32.totalorder %s25, 1
      %s27 = scalar_select %p26, 0, %s25
      %s28 = sadd.s32 1, %s19
      %s29 = scalar_select %p26, %s28, %s19
      %p30 = scmp.ge.s32.totalorder %s29, 2
      %s31 = scalar_select %p30, 0, %s29
      %s32 = ssub.s32 %s19, %s31
      %s33 = ssub.s32 %s20, %s27
      %s34 = sor.u32 %s32, %s33
      %p35 = scmp.eq.s32.totalorder %s34, 0
      %s37 = sadd.s32 %s36, 1
      %s38 = scalar_select %p35, %s36, %s37
      %p41 = pneg %p35
      %p42 = scmp.eq.s32.totalorder %s12, 1
      %p43 = por %p41, %p42
      %p44 = scmp.ne.s32.totalorder %s36, %s39
      %p45 = scmp.eq.s32.totalorder %s12, 0
      %p46 = por %p44, %p45
      %p47 = scmp.ne.s32.totalorder %s36, %s39
      %p48 = scmp.eq.s32.totalorder %s17, 1
      %p49 = por %p47, %p48
      %p50 = scmp.ne.s32.totalorder %s39, %s40
      %p51 = scmp.eq.s32.totalorder %s17, 0
      %p52 = por %p50, %p51
      %p53 = scmp.ne.s32.totalorder %s39, %s40
      %p54 = scmp.eq.s32.totalorder %s18, 1
      %p55 = por %p53, %p54
      %p57 = scmp.ne.s32.totalorder %s40, %s56
      %p58 = scmp.eq.s32.totalorder %s18, 0
      %p59 = por %p57, %p58
      %s61 = sadd.s32 %s60, 1
      %p64 = scmp.eq.s32.totalorder %s12, 1
      %p65 = scmp.ne.s32.totalorder %s60, %s62
      %p66 = scmp.eq.s32.totalorder %s12, 0
      %p67 = por %p65, %p66
      %p68 = scmp.ne.s32.totalorder %s60, %s62
      %p69 = scmp.eq.s32.totalorder %s17, 1
      %p70 = por %p68, %p69
      %p71 = scmp.ne.s32.totalorder %s62, %s63
      %p72 = scmp.eq.s32.totalorder %s17, 0
      %p73 = por %p71, %p72
      %p74 = scmp.ne.s32.totalorder %s62, %s63
      %p75 = scmp.eq.s32.totalorder %s18, 1
      %p76 = por %p74, %p75
      %p78 = scmp.ne.s32.totalorder %s63, %s77
      %p79 = scmp.eq.s32.totalorder %s18, 0
      %p80 = por %p78, %p79
      %s82 = sadd.s32 %s81, 1
      %p85 = scmp.eq.s32.totalorder %s12, 1
      %p86 = scmp.ne.s32.totalorder %s81, %s83
      %p87 = scmp.eq.s32.totalorder %s12, 0
      %p88 = por %p86, %p87
      %p89 = scmp.ne.s32.totalorder %s81, %s83
      %p90 = scmp.eq.s32.totalorder %s17, 1
      %p91 = por %p89, %p90
      %p92 = scmp.ne.s32.totalorder %s83, %s84
      %p93 = scmp.eq.s32.totalorder %s17, 0
      %p94 = por %p92, %p93
      %p95 = scmp.ne.s32.totalorder %s83, %s84
      %p96 = scmp.eq.s32.totalorder %s18, 1
      %p97 = por %p95, %p96
      %p99 = scmp.ne.s32.totalorder %s84, %s98
      %p100 = scmp.eq.s32.totalorder %s18, 0
      %p101 = por %p99, %p100
      %s102 = ssub.s32 %s19, %s31
      %p103 = scmp.eq.s32.totalorder %s102, 0
      %s105 = sadd.s32 %s104, 1
      %s106 = scalar_select %p103, %s104, %s105
      %p109 = pneg %p103
      %p110 = scmp.eq.s32.totalorder %s12, 1
      %p111 = por %p109, %p110
      %p112 = scmp.ne.s32.totalorder %s104, %s107
      %p113 = scmp.eq.s32.totalorder %s12, 0
      %p114 = por %p112, %p113
      %p115 = scmp.ne.s32.totalorder %s104, %s107
      %p116 = scmp.eq.s32.totalorder %s17, 1
      %p117 = por %p115, %p116
      %p118 = scmp.ne.s32.totalorder %s107, %s108
      %p119 = scmp.eq.s32.totalorder %s17, 0
      %p120 = por %p118, %p119
      %p121 = scmp.ne.s32.totalorder %s107, %s108
      %p122 = scmp.eq.s32.totalorder %s18, 1
      %p123 = por %p121, %p122
      %p125 = scmp.ne.s32.totalorder %s108, %s124
      %p126 = scmp.eq.s32.totalorder %s18, 0
      %p127 = por %p125, %p126
      %p128 = scmp.le.s32.totalorder 1, %s12
      %p129 = scmp.lt.s32.totalorder %s12, 3
      %p130 = pnand %p128, %p129
      %p131 = pneg %p130
      // Predicated region
      $region9: #{tpu_custom_call.1} parent=5 // pred_check
        _
      $region10: #{tpu_custom_call.1} parent=5 // pred_check_branch
        %133 = sbr.rel (%p130) target = $region12
      $region11: #{tpu_custom_call.1} parent=5 // pred_region
        %s134 = ssub.s32 %s12, 1
        // Predicated region
        $region13: #{tpu_custom_call.1} parent=11 // pred_check
          %p135 = pneg %p73
        $region14: #{tpu_custom_call.1} parent=11 // pred_check_branch
          %137 = sbr.rel (%p135) target = $region16
        $region15: #{tpu_custom_call.1} parent=11 // pred_region
          _
        $region16: #{tpu_custom_call.1} parent=11 // pred_fallthru
          _
        // Predicated region
        $region17: #{tpu_custom_call.1} parent=11 // pred_check
          %p138 = pneg %p94
        $region18: #{tpu_custom_call.1} parent=11 // pred_check_branch
          %140 = sbr.rel (%p138) target = $region20
        $region19: #{tpu_custom_call.1} parent=11 // pred_region
          _
        $region20: #{tpu_custom_call.1} parent=11 // pred_fallthru
          _
      $region12: #{tpu_custom_call.1} parent=5 // pred_fallthru
        _
      %p141 = scmp.lt.s32.totalorder %s12, 2
      // Predicated region
      $region21: #{tpu_custom_call.1} parent=5 // pred_check
        %p142 = pneg %p141
      $region22: #{tpu_custom_call.1} parent=5 // pred_check_branch
        %144 = sbr.rel (%p142) target = $region24
      $region23: #{tpu_custom_call.1} parent=5 // pred_region
        // Predicated region
        $region25: #{tpu_custom_call.1} parent=23 // pred_check
          %p145 = pneg %p46
        $region26: #{tpu_custom_call.1} parent=23 // pred_check_branch
          %147 = sbr.rel (%p145) target = $region28
        $region27: #{tpu_custom_call.1} parent=23 // pred_region
          %s148 = sand.u32 %s36, 1
          %s149 = scalar_lea.sflag [#allocation4], %s148
          %s150 = sand.u32 %s36, 1
          %s151 = smul.addr %s150, 16
          %s152 = scalar_lea.vmem [#allocation3], %s151
          %s153 = smul.u32 2, %s20
          %s155 = ssub.s32 256, 256
          %156 = vsyncadd %s149, %s155
          %s157 = smul.addr %s19, 2
          %s158 = sadd.s32 %s153, %s157
          %s159 = smul.addr %s158, 128
          %s160 = scalar_lea.hbm %s0, %s159
          %s162 = sshll.u32 %s152, 4
          %s163 = int_to_ptr.vmem [resolvable:$true] %s162
          %165 = dma.hbm_to_vmem [thread:$0]  %s160, 256, %s163, %s149
        $region28: #{tpu_custom_call.1} parent=23 // pred_fallthru
          _
      $region24: #{tpu_custom_call.1} parent=5 // pred_fallthru
        _
      %p166 = scmp.le.s32.totalorder 1, %s12
      %p167 = scmp.lt.s32.totalorder %s12, 3
      %p168 = pnand %p166, %p167
      %p169 = pneg %p168
      // Predicated region
      $region29: #{tpu_custom_call.1} parent=5 // pred_check
        _
      $region30: #{tpu_custom_call.1} parent=5 // pred_check_branch
        %171 = sbr.rel (%p168) target = $region32
      $region31: #{tpu_custom_call.1} parent=5 // pred_region
        %s172 = ssub.s32 %s12, 1
        %s173 = sand.u32 %s39, 1
        %s174 = scalar_lea.sflag [#allocation4], %s173
        %s175 = sand.u32 %s39, 1
        %s176 = smul.addr %s175, 16
        %s177 = scalar_lea.vmem [#allocation3], %s176
        // Predicated region
        $region33: #{tpu_custom_call.1} parent=31 // pred_check
          %p178 = pneg %p52
        $region34: #{tpu_custom_call.1} parent=31 // pred_check_branch
          %180 = sbr.rel (%p178) target = $region36
        $region35: #{tpu_custom_call.1} parent=31 // pred_region
          %181 = dma.done %s174, 256
        $region36: #{tpu_custom_call.1} parent=31 // pred_fallthru
          _
        %s182 = sand.u32 %s39, 1
        %s183 = scalar_lea.sflag [#allocation4], %s182
        %s184 = sand.u32 %s39, 1
        %s185 = smul.addr %s184, 16
        %s186 = scalar_lea.vmem [#allocation3], %s185
        %p187 = pneg %p52
        %p188 = pneg %p49
        %p189 = pneg %p73
        %p190 = pneg %p70
        %p191 = pneg %p94
        %p192 = pneg %p91
        %p193 = pneg %p120
        %p194 = pneg %p117
        %p195 = scmp.lt.s32.totalorder %s21, 1
        %s196 = scalar_select %p195, %s21, 1
        %s197 = smul.addr %s196, 8
        %s198 = scalar_lea.vmem %s3, %s197
        %s199 = smul.u32 2, %s22
        %p200 = scmp.lt.s32.totalorder %s21, 1
        %s201 = scalar_select %p200, %s21, 1
        %s202 = smul.addr %s201, 8
        %s203 = scalar_lea.vmem %s3, %s202
        %p204 = scmp.eq.s32.totalorder %s22, 0
        // Predicated region
        $region37: #{tpu_custom_call.1} parent=31 // pred_check
          %p205 = pneg %p204
        $region38: #{tpu_custom_call.1} parent=31 // pred_check_branch
          %207 = sbr.rel (%p205) target = $region40
        $region39: #{tpu_custom_call.1} parent=31 // pred_region
          %vm208 = vcmask 7168
          %209 = vst.msk [vmem:[#allocation2] sm:$0xff] %vm208, 0.0
        $region40: #{tpu_custom_call.1} parent=31 // pred_fallthru
          _
        %v210 = vld [vmem:[%s177] sm:$0xff]
        %v211 = vld [vmem:[%s177 + $0x8] sm:$0xff]
        %v212 = vld [vmem:[#allocation2] sm:$0xff]
        %v213 = vadd.f32 %v210, %v211
        %214 = vadd.xlane.f32.xlu0 %v213
        %v215 = vpop.xlane.xlu0 %214
        %v216 = vadd.f32 %v212, %v215
        %vm217 = vcmask 7168
        %218 = vst.msk [vmem:[#allocation2] sm:$0xff] %vm217, %v216
        // Predicated region
        $region41: #{tpu_custom_call.1} parent=31 // pred_check
          %p219 = pneg %p204
        $region42: #{tpu_custom_call.1} parent=31 // pred_check_branch
          %221 = sbr.rel (%p219) target = $region44
        $region43: #{tpu_custom_call.1} parent=31 // pred_region
          %v222 = vld [vmem:[#allocation2] sm:$0xff]
          %v223 = vmul.f32 %v222, 0.00390625
          %v224 = vld [vmem:[%s1] sm:$0xff]
          %v225 = vld [vmem:[%s2] sm:$0xff]
          %227 = vset.pattern.permute.xlu0 0
          %228 = vperm.xlu0 %227, %v223
          %v229 = vpop.permute.xlu0 %228
          %v231 = vmul.f32 %v224, %v229
          %vm232 = vcmask 15360
          %v233 = vsel %vm232, %v231, 0.0
          %v234 = vrot.slane %v233, 4
          %v235 = vadd.f32 %v233, %v234
          %v236 = vrot.slane %v235, 2
          %v237 = vadd.f32 %v235, %v236
          %v238 = vrot.slane %v237, 1
          %v239 = vadd.f32 %v237, %v238
          %v240 = vmax.f32 %v239, 0.0
          %v241 = vmul.f32 %v225, %v240
          %v242 = vsel %vm232, %v241, 0.0
          %243 = vadd.xlane.f32.xlu0 %v242
          %v244 = vpop.xlane.xlu0 %243
          %v245 = vxor.u32 %v244, 2147483648
          %v246 = vmul.f32 %v245, 1.442695
          %v247 = vpow.pop %v246
          %v248 = vadd.f32 %v247, 1.0
          %v249 = vrcp.pop %v248
          %v250 = vmul.f32 1.0, %v249
          %251 = vst.msk [vmem:[%s203] sm:$0xff] %vm217, %v250
        $region44: #{tpu_custom_call.1} parent=31 // pred_fallthru
          _
        %p252 = scmp.lt.s32.totalorder %s21, 1
        %s253 = scalar_select %p252, %s21, 1
        %s254 = smul.addr %s253, 8
        %s255 = scalar_lea.vmem %s3, %s254
        // Predicated region
        $region45: #{tpu_custom_call.1} parent=31 // pred_check
          %p256 = pneg %p117
        $region46: #{tpu_custom_call.1} parent=31 // pred_check_branch
          %258 = sbr.rel (%p256) target = $region48
        $region47: #{tpu_custom_call.1} parent=31 // pred_region
          _
        $region48: #{tpu_custom_call.1} parent=31 // pred_fallthru
          _
      $region32: #{tpu_custom_call.1} parent=5 // pred_fallthru
        _
      %p259 = scmp.le.s32.totalorder 2, %s12
      // Predicated region
      $region49: #{tpu_custom_call.1} parent=5 // pred_check
        %p260 = pneg %p259
      $region50: #{tpu_custom_call.1} parent=5 // pred_check_branch
        %262 = sbr.rel (%p260) target = $region52
      $region51: #{tpu_custom_call.1} parent=5 // pred_region
        %s263 = ssub.s32 %s12, 2
        // Predicated region
        $region53: #{tpu_custom_call.1} parent=51 // pred_check
          %p264 = pneg %p123
        $region54: #{tpu_custom_call.1} parent=51 // pred_check_branch
          %266 = sbr.rel (%p264) target = $region56
        $region55: #{tpu_custom_call.1} parent=51 // pred_region
          %p267 = scmp.lt.s32.totalorder %s23, 1
          %s268 = scalar_select %p267, %s23, 1
          %s269 = smul.addr %s268, 8
          %s270 = scalar_lea.vmem %s3, %s269
        $region56: #{tpu_custom_call.1} parent=51 // pred_fallthru
          _
      $region52: #{tpu_custom_call.1} parent=5 // pred_fallthru
        _
    $region6: #{tpu_custom_call.1} parent=1 // loop_footer
      %s16 = sadd.s32 1, %s12
    $region7: #{tpu_custom_call.1} parent=1 // loop_footer_branch
      %11 = sbr.rel target = $region3
    $region8: #{tpu_custom_call.1} parent=1 // loop_exit
      _
    %271 = vsyncpa [#allocation4], 1
    %s272 = scalar_lea.sflag [#allocation4], 1
    %273 = vsyncpa %s272, 1

</llo_original>
